<compile_context>
chip_gen: v6e
topology: v6e:2x2x1
jax: 0.10.0
libtpu: 0.0.40
codegen_flags: <defaults>
</compile_context>

<pallas_src>
import jax
import jax.numpy as jnp
from jax.experimental import pallas as pl
from jax.experimental.pallas import tpu as pltpu


# --------------------------------------------------------------------------- #
# Kernel 1: Bahdanau attention + single-step GRU cell
# --------------------------------------------------------------------------- #
def attn_gru_kernel(emb_ref, enc_ref, h_ref,
                    wah_ref, wae_ref, ba_ref, v_ref,
                    wie_ref, wic_ref, whh_ref, bih_ref, bhh_ref,
                    hout_ref):
    emb = emb_ref[...]                                   # (B, E)   f32
    enc = enc_ref[...]                                   # (B, S, 2H) weight dtype
    h = h_ref[...]                                       # (B, H)   f32
    B, S, _ = enc.shape
    H = h.shape[1]
    wdt = wah_ref.dtype                                  # matmul (weight) dtype

    # ---- attention: softmax_s( v . tanh(h W_h + enc W_e + b_a) ) ----
    h_wa = jnp.dot(h.astype(wdt), wah_ref[...],
                   preferred_element_type=jnp.float32)                    # (B, H)
    e_wa = jnp.einsum('bsk,kh->bsh', enc, wae_ref[...],
                      preferred_element_type=jnp.float32)                 # (B, S, H)
    energy = jnp.tanh(e_wa + h_wa[:, None, :] + ba_ref[...])              # (B, S, H) f32
    score = jnp.sum(energy * v_ref[...], axis=-1)                         # (B, S)
    score = score - jnp.max(score, axis=-1, keepdims=True)
    p = jnp.exp(score)
    attn = p / jnp.sum(p, axis=-1, keepdims=True)                         # (B, S)

    # ---- context = attn @ enc on the MXU (batched (1,S)x(S,2H)) ----
    ctx3 = jnp.einsum('bqs,bsk->bqk',
                      attn[:, None, :].astype(enc.dtype), enc,
                      preferred_element_type=jnp.float32)                 # (B, 1, 2H)
    context = ctx3.reshape(B, enc.shape[2])                               # (B, 2H) f32

    # ---- single-step GRU cell (PyTorch gate order r, z, n) ----
    gi = (jnp.dot(emb.astype(wdt), wie_ref[...],
                  preferred_element_type=jnp.float32)
          + jnp.dot(context.astype(wdt), wic_ref[...],
                    preferred_element_type=jnp.float32)
          + bih_ref[...])                                                 # (B, 3H)
    gh = jnp.dot(h.astype(wdt), whh_ref[...],
                 preferred_element_type=jnp.float32) + bhh_ref[...]       # (B, 3H)
    r = jax.nn.sigmoid(gi[:, 0 * H:1 * H] + gh[:, 0 * H:1 * H])
    z = jax.nn.sigmoid(gi[:, 1 * H:2 * H] + gh[:, 1 * H:2 * H])
    n = jnp.tanh(gi[:, 2 * H:3 * H] + r * gh[:, 2 * H:3 * H])
    hout_ref[...] = (1.0 - z) * n + z * h                                 # (B, H)


# --------------------------------------------------------------------------- #
# Kernel 2: output projection, tiled over the vocabulary
# --------------------------------------------------------------------------- #
def fc_kernel(h_ref, w_ref, b_ref, out_ref):
    out_ref[...] = (jnp.dot(h_ref[...].astype(w_ref.dtype), w_ref[...],
                            preferred_element_type=jnp.float32)
                    + b_ref[...])


def _round_up(x, m):
    return ((x + m - 1) // m) * m


def decoder_forward(x_tokens, enc_bm, hidden, params, *,
                    tile_v_max=512, weight_dtype=jnp.float32):
    """x_tokens: (B,) int32; enc_bm: (B, S, 2H) batch-major encoder output
    (the (S,B,2H)->(B,S,2H) transpose is loop-invariant: do it once outside the
    autoregressive loop); hidden: (B, H).  Returns (logits (B,V), h_new (B,H))."""
    B, S, twoH = enc_bm.shape
    H = hidden.shape[1]
    V = params['w_fc'].shape[1]

    # Glue: embedding gather (dropout = identity in eval).
    emb = jnp.take(params['embedding'], x_tokens, axis=0)                 # (B, E)

    wd = weight_dtype
    enc_k = enc_bm.astype(wd)

    # ---- call 1: attention + GRU -> h_new (hidden buffer aliased to output) ----
    h_new = pl.pallas_call(
        attn_gru_kernel,
        out_shape=jax.ShapeDtypeStruct((B, H), jnp.float32),
        input_output_aliases={2: 0},     # hidden (input 2) -> h_new (output 0)
        compiler_params=pltpu.CompilerParams(vmem_limit_bytes=32 * 1024 * 1024),
    )(emb, enc_k, hidden,
      params['w_attn_h'].astype(wd), params['w_attn_e'].astype(wd),
      params['b_attn'], params['v_attn'],
      params['w_ih_emb'].astype(wd), params['w_ih_ctx'].astype(wd),
      params['w_hh'].astype(wd), params['b_ih'], params['b_hh'])

    # ---- call 2: logits = h_new @ w_fc + b_fc, tiled over V ----
    tile_v = min(tile_v_max, _round_up(V, 128))
    v_pad = _round_up(V, tile_v)
    w_fc = params['w_fc'].astype(wd)
    b_fc = params['b_fc']
    if v_pad != V:
        # In a real decode loop, pad w_fc/b_fc once at parameter-load time.
        w_fc = jnp.pad(w_fc, ((0, 0), (0, v_pad - V)))
        b_fc = jnp.pad(b_fc, ((0, 0), (0, v_pad - V)))
    n_tiles = v_pad // tile_v

    logits_p = pl.pallas_call(
        fc_kernel,
        out_shape=jax.ShapeDtypeStruct((B, v_pad), jnp.float32),
        grid_spec=pltpu.PrefetchScalarGridSpec(
            num_scalar_prefetch=0,
            grid=(n_tiles,),
            in_specs=[pl.BlockSpec((B, H), lambda j: (0, 0)),
                      pl.BlockSpec((H, tile_v), lambda j: (0, j)),
                      pl.BlockSpec((1, tile_v), lambda j: (0, j))],
            out_specs=pl.BlockSpec((B, tile_v), lambda j: (0, j))),
        compiler_params=pltpu.CompilerParams(
            dimension_semantics=("parallel",),     # megacore-shard V axis on v7x
            vmem_limit_bytes=32 * 1024 * 1024),
        cost_estimate=pl.CostEstimate(
            flops=2 * B * H * v_pad, transcendentals=0,
            bytes_accessed=(B * H + H * v_pad + v_pad + B * v_pad) * 4),
    )(h_new, w_fc, b_fc)

    logits = logits_p[:, :V]
    return logits, h_new


# --------------------------------------------------------------------------- #
# Pure-JAX reference (mirrors the PyTorch forward, concatenated-weight layout)
# --------------------------------------------------------------------------- #
def decoder_reference(x_tokens, encoder_output, hidden, params):
    emb = jnp.take(params['embedding'], x_tokens, axis=0)
    enc = jnp.transpose(encoder_output, (1, 0, 2))                        # (B, S, 2H)
    B, S, _ = enc.shape
    H = hidden.shape[1]
    w_attn = jnp.concatenate([params['w_attn_h'], params['w_attn_e']], axis=0)
    w_ih = jnp.concatenate([params['w_ih_emb'], params['w_ih_ctx']], axis=0)
    h_rep = jnp.broadcast_to(hidden[:, None, :], (B, S, H))
    cat = jnp.concatenate([h_rep, enc], axis=2)
    energy = jnp.tanh(cat @ w_attn + params['b_attn'])
    score = jnp.sum(energy * params['v_attn'], axis=-1)
    attn = jax.nn.softmax(score, axis=-1)
    context = jnp.einsum('bs,bsk->bk', attn, enc)
    rnn_in = jnp.concatenate([emb, context], axis=1)
    gi = rnn_in @ w_ih + params['b_ih']
    gh = hidden @ params['w_hh'] + params['b_hh']
    r = jax.nn.sigmoid(gi[:, :H] + gh[:, :H])
    z = jax.nn.sigmoid(gi[:, H:2 * H] + gh[:, H:2 * H])
    n = jnp.tanh(gi[:, 2 * H:] + r * gh[:, 2 * H:])
    h_new = (1.0 - z) * n + z * hidden
    logits = h_new @ params['w_fc'] + params['b_fc']
    return logits, h_new


def init_params(key, vocab, embed_dim, hidden):
    ks = jax.random.split(key, 12)

    def rnd(k, shape, scale=0.1):
        return (scale * jax.random.normal(k, shape)).astype(jnp.float32)

    emb_table = rnd(ks[0], (vocab, embed_dim))
    emb_table = emb_table.at[0].set(0.0)                                  # padding_idx=0
    return dict(
        embedding=emb_table,
        # Attention nn.Linear(3H, H) transposed, split along in_features [h | enc].
        w_attn_h=rnd(ks[1], (hidden, hidden)),
        w_attn_e=rnd(ks[2], (2 * hidden, hidden)),
        b_attn=rnd(ks[3], (1, hidden)),
        v_attn=rnd(ks[4], (1, hidden)),          # nn.Linear(H, 1, bias=False)
        # GRU weight_ih (3H, E+2H) transposed, split along in_features [emb | ctx].
        w_ih_emb=rnd(ks[5], (embed_dim, 3 * hidden)),
        w_ih_ctx=rnd(ks[6], (2 * hidden, 3 * hidden)),
        w_hh=rnd(ks[7], (hidden, 3 * hidden)),
        b_ih=rnd(ks[8], (1, 3 * hidden)),
        b_hh=rnd(ks[9], (1, 3 * hidden)),
        # fc: nn.Linear(H, output_size), transposed.
        w_fc=rnd(ks[10], (hidden, vocab)),
        b_fc=rnd(ks[11], (1, vocab)),
    )


if __name__ == "__main__":
    B, S, H, E, V = 2, 8, 32, 16, 12     # batch, src_len, hidden, embed_dim, output_size

    key = jax.random.PRNGKey(0)
    k_par, k_x, k_enc, k_h = jax.random.split(key, 4)

    params = init_params(k_par, V, E, H)
    x_tokens = jax.random.randint(k_x, (B,), 0, V, dtype=jnp.int32)            # (B,)
    encoder_output = jax.random.normal(k_enc, (S, B, 2 * H), jnp.float32)      # (S, B, 2H)
    hidden = jax.random.normal(k_h, (B, H), jnp.float32)                       # (B, H)

    # Loop-invariant layout change: done ONCE, not per decode step.
    enc_bm = jnp.transpose(encoder_output, (1, 0, 2))                          # (B, S, 2H)

    fwd = jax.jit(decoder_forward, static_argnames=("tile_v_max", "weight_dtype"))

    # --- f32 weights: exact check against the pure-JAX reference ---
    logits, h_new = fwd(x_tokens, enc_bm, hidden, params)
    logits = jax.block_until_ready(logits)
    h_new = jax.block_until_ready(h_new)

    ref_logits, ref_h = decoder_reference(x_tokens, encoder_output, hidden, params)
    assert logits.shape == (B, V) and h_new.shape == (B, H)
    assert jnp.allclose(logits, ref_logits, atol=1e-4, rtol=1e-4)
    assert jnp.allclose(h_new, ref_h, atol=1e-4, rtol=1e-4)

    # --- bf16 weight storage (v6e/v7x production config), f32 accumulation ---
    logits_bf, h_bf = fwd(x_tokens, enc_bm, hidden, params, weight_dtype=jnp.bfloat16)
    logits_bf = jax.block_until_ready(logits_bf)
    h_bf = jax.block_until_ready(h_bf)
    assert jnp.allclose(logits_bf, ref_logits, atol=5e-2, rtol=5e-2)
    assert jnp.allclose(h_bf, ref_h, atol=5e-2, rtol=5e-2)

    print("KERNEL_OK")
</pallas_src>

<mosaic_0001>
module attributes {stable_mosaic.version = 11 : i64} {
  func.func @attn_gru_kernel(%arg0: memref<2x16xf32, #tpu.memory_space<vmem>>, %arg1: memref<2x8x64xf32, #tpu.memory_space<vmem>>, %arg2: memref<2x32xf32, #tpu.memory_space<vmem>>, %arg3: memref<32x32xf32, #tpu.memory_space<vmem>>, %arg4: memref<64x32xf32, #tpu.memory_space<vmem>>, %arg5: memref<1x32xf32, #tpu.memory_space<vmem>>, %arg6: memref<1x32xf32, #tpu.memory_space<vmem>>, %arg7: memref<16x96xf32, #tpu.memory_space<vmem>>, %arg8: memref<64x96xf32, #tpu.memory_space<vmem>>, %arg9: memref<32x96xf32, #tpu.memory_space<vmem>>, %arg10: memref<1x96xf32, #tpu.memory_space<vmem>>, %arg11: memref<1x96xf32, #tpu.memory_space<vmem>>, %arg12: memref<2x32xf32, #tpu.memory_space<vmem>>) attributes {dimension_semantics = [], scalar_prefetch = 0 : i64, scratch_operands = 0 : i64, tpu.core_type = #tpu.core_type<tc>} {
    %c0 = arith.constant 0 : index
    %c0_0 = arith.constant 0 : index
    %0 = vector.load %arg0[%c0, %c0_0] : memref<2x16xf32, #tpu.memory_space<vmem>>, vector<2x16xf32>
    %c0_1 = arith.constant 0 : index
    %c0_2 = arith.constant 0 : index
    %c0_3 = arith.constant 0 : index
    %1 = vector.load %arg1[%c0_1, %c0_2, %c0_3] : memref<2x8x64xf32, #tpu.memory_space<vmem>>, vector<2x8x64xf32>
    %c0_4 = arith.constant 0 : index
    %c0_5 = arith.constant 0 : index
    %2 = vector.load %arg2[%c0_4, %c0_5] : memref<2x32xf32, #tpu.memory_space<vmem>>, vector<2x32xf32>
    %c0_6 = arith.constant 0 : index
    %c0_7 = arith.constant 0 : index
    %3 = vector.load %arg3[%c0_6, %c0_7] : memref<32x32xf32, #tpu.memory_space<vmem>>, vector<32x32xf32>
    %cst = arith.constant dense<0.000000e+00> : vector<2x32xf32>
    %4 = tpu.matmul %2, %3, %cst {dimension_numbers = #tpu.dot_dimension_numbers<[1], [0], [0], [1], [0, 0, 1, 1], [], []>} : vector<2x32xf32>, vector<32x32xf32>, vector<2x32xf32> -> vector<2x32xf32>
    %c0_8 = arith.constant 0 : index
    %c0_9 = arith.constant 0 : index
    %5 = vector.load %arg4[%c0_8, %c0_9] : memref<64x32xf32, #tpu.memory_space<vmem>>, vector<64x32xf32>
    "tpu.trace_start"() <{level = 10 : i32, message = "bsk,kh->bsh"}> : () -> ()
    %cst_10 = arith.constant dense<0.000000e+00> : vector<2x8x32xf32>
    %6 = tpu.matmul %1, %5, %cst_10 {dimension_numbers = #tpu.dot_dimension_numbers<[2], [0], [0, 1], [1], [0, 0, 0, 1, 1, 1], [], []>} : vector<2x8x64xf32>, vector<64x32xf32>, vector<2x8x32xf32> -> vector<2x8x32xf32>
    "tpu.trace_stop"() : () -> ()
    %7 = vector.shape_cast %4 : vector<2x32xf32> to vector<2x1x32xf32>
    %8 = vector.broadcast %7 : vector<2x1x32xf32> to vector<2x8x32xf32>
    %9 = arith.addf %6, %8 : vector<2x8x32xf32>
    %c0_11 = arith.constant 0 : index
    %c0_12 = arith.constant 0 : index
    %10 = vector.load %arg5[%c0_11, %c0_12] : memref<1x32xf32, #tpu.memory_space<vmem>>, vector<1x32xf32>
    %11 = vector.shape_cast %10 : vector<1x32xf32> to vector<1x1x32xf32>
    %12 = vector.broadcast %11 : vector<1x1x32xf32> to vector<2x8x32xf32>
    %13 = arith.addf %9, %12 : vector<2x8x32xf32>
    %14 = math.tanh %13 : vector<2x8x32xf32>
    %c0_13 = arith.constant 0 : index
    %c0_14 = arith.constant 0 : index
    %15 = vector.load %arg6[%c0_13, %c0_14] : memref<1x32xf32, #tpu.memory_space<vmem>>, vector<1x32xf32>
    %16 = vector.shape_cast %15 : vector<1x32xf32> to vector<1x1x32xf32>
    %17 = vector.broadcast %16 : vector<1x1x32xf32> to vector<2x8x32xf32>
    %18 = arith.mulf %14, %17 : vector<2x8x32xf32>
    %cst_15 = arith.constant dense<0.000000e+00> : vector<2x8xf32>
    %19 = vector.multi_reduction <add>, %18, %cst_15 [2] : vector<2x8x32xf32> to vector<2x8xf32>
    %cst_16 = arith.constant dense<0xFF800000> : vector<2xf32>
    %20 = vector.multi_reduction <maximumf>, %19, %cst_16 [1] : vector<2x8xf32> to vector<2xf32>
    %21 = vector.shape_cast %20 : vector<2xf32> to vector<2x1xf32>
    %22 = vector.broadcast %21 : vector<2x1xf32> to vector<2x8xf32>
    %23 = arith.subf %19, %22 : vector<2x8xf32>
    %24 = math.exp %23 : vector<2x8xf32>
    %cst_17 = arith.constant dense<0.000000e+00> : vector<2xf32>
    %25 = vector.multi_reduction <add>, %24, %cst_17 [1] : vector<2x8xf32> to vector<2xf32>
    %26 = vector.shape_cast %25 : vector<2xf32> to vector<2x1xf32>
    %27 = vector.broadcast %26 : vector<2x1xf32> to vector<2x8xf32>
    %28 = arith.divf %24, %27 : vector<2x8xf32>
    %29 = vector.shape_cast %28 : vector<2x8xf32> to vector<2x1x8xf32>
    "tpu.trace_start"() <{level = 10 : i32, message = "bqs,bsk->bqk"}> : () -> ()
    %cst_18 = arith.constant dense<0.000000e+00> : vector<2x1x64xf32>
    %30 = tpu.matmul %29, %1, %cst_18 {dimension_numbers = #tpu.dot_dimension_numbers<[2], [1], [1], [2], [0, 0, 0, 1, 1, 2], [0], [0]>} : vector<2x1x8xf32>, vector<2x8x64xf32>, vector<2x1x64xf32> -> vector<2x1x64xf32>
    "tpu.trace_stop"() : () -> ()
    %31 = vector.shape_cast %30 : vector<2x1x64xf32> to vector<2x64xf32>
    %c0_19 = arith.constant 0 : index
    %c0_20 = arith.constant 0 : index
    %32 = vector.load %arg7[%c0_19, %c0_20] : memref<16x96xf32, #tpu.memory_space<vmem>>, vector<16x96xf32>
    %cst_21 = arith.constant dense<0.000000e+00> : vector<2x96xf32>
    %33 = tpu.matmul %0, %32, %cst_21 {dimension_numbers = #tpu.dot_dimension_numbers<[1], [0], [0], [1], [0, 0, 1, 1], [], []>} : vector<2x16xf32>, vector<16x96xf32>, vector<2x96xf32> -> vector<2x96xf32>
    %c0_22 = arith.constant 0 : index
    %c0_23 = arith.constant 0 : index
    %34 = vector.load %arg8[%c0_22, %c0_23] : memref<64x96xf32, #tpu.memory_space<vmem>>, vector<64x96xf32>
    %cst_24 = arith.constant dense<0.000000e+00> : vector<2x96xf32>
    %35 = tpu.matmul %31, %34, %cst_24 {dimension_numbers = #tpu.dot_dimension_numbers<[1], [0], [0], [1], [0, 0, 1, 1], [], []>} : vector<2x64xf32>, vector<64x96xf32>, vector<2x96xf32> -> vector<2x96xf32>
    %36 = arith.addf %33, %35 : vector<2x96xf32>
    %c0_25 = arith.constant 0 : index
    %c0_26 = arith.constant 0 : index
    %37 = vector.load %arg10[%c0_25, %c0_26] : memref<1x96xf32, #tpu.memory_space<vmem>>, vector<1x96xf32>
    %38 = vector.broadcast %37 : vector<1x96xf32> to vector<2x96xf32>
    %39 = arith.addf %36, %38 : vector<2x96xf32>
    %c0_27 = arith.constant 0 : index
    %c0_28 = arith.constant 0 : index
    %40 = vector.load %arg9[%c0_27, %c0_28] : memref<32x96xf32, #tpu.memory_space<vmem>>, vector<32x96xf32>
    %cst_29 = arith.constant dense<0.000000e+00> : vector<2x96xf32>
    %41 = tpu.matmul %2, %40, %cst_29 {dimension_numbers = #tpu.dot_dimension_numbers<[1], [0], [0], [1], [0, 0, 1, 1], [], []>} : vector<2x32xf32>, vector<32x96xf32>, vector<2x96xf32> -> vector<2x96xf32>
    %c0_30 = arith.constant 0 : index
    %c0_31 = arith.constant 0 : index
    %42 = vector.load %arg11[%c0_30, %c0_31] : memref<1x96xf32, #tpu.memory_space<vmem>>, vector<1x96xf32>
    %43 = vector.broadcast %42 : vector<1x96xf32> to vector<2x96xf32>
    %44 = arith.addf %41, %43 : vector<2x96xf32>
    %45 = vector.extract_strided_slice %39 {offsets = [0, 0], sizes = [2, 32], strides = [1, 1]} : vector<2x96xf32> to vector<2x32xf32>
    %46 = vector.extract_strided_slice %44 {offsets = [0, 0], sizes = [2, 32], strides = [1, 1]} : vector<2x96xf32> to vector<2x32xf32>
    %47 = arith.addf %45, %46 : vector<2x32xf32>
    %48 = arith.negf %47 : vector<2x32xf32>
    %49 = math.exp %48 : vector<2x32xf32>
    %cst_32 = arith.constant 1.000000e+00 : f32
    %50 = vector.broadcast %cst_32 : f32 to vector<2x32xf32>
    %51 = arith.addf %50, %49 : vector<2x32xf32>
    %52 = arith.divf %50, %51 : vector<2x32xf32>
    %53 = vector.extract_strided_slice %39 {offsets = [0, 32], sizes = [2, 32], strides = [1, 1]} : vector<2x96xf32> to vector<2x32xf32>
    %54 = vector.extract_strided_slice %44 {offsets = [0, 32], sizes = [2, 32], strides = [1, 1]} : vector<2x96xf32> to vector<2x32xf32>
    %55 = arith.addf %53, %54 : vector<2x32xf32>
    %56 = arith.negf %55 : vector<2x32xf32>
    %57 = math.exp %56 : vector<2x32xf32>
    %cst_33 = arith.constant 1.000000e+00 : f32
    %58 = vector.broadcast %cst_33 : f32 to vector<2x32xf32>
    %59 = arith.addf %58, %57 : vector<2x32xf32>
    %60 = arith.divf %58, %59 : vector<2x32xf32>
    %61 = vector.extract_strided_slice %39 {offsets = [0, 64], sizes = [2, 32], strides = [1, 1]} : vector<2x96xf32> to vector<2x32xf32>
    %62 = vector.extract_strided_slice %44 {offsets = [0, 64], sizes = [2, 32], strides = [1, 1]} : vector<2x96xf32> to vector<2x32xf32>
    %63 = arith.mulf %52, %62 : vector<2x32xf32>
    %64 = arith.addf %61, %63 : vector<2x32xf32>
    %65 = math.tanh %64 : vector<2x32xf32>
    %cst_34 = arith.constant 1.000000e+00 : f32
    %66 = vector.broadcast %cst_34 : f32 to vector<2x32xf32>
    %67 = arith.subf %66, %60 : vector<2x32xf32>
    %68 = arith.mulf %67, %65 : vector<2x32xf32>
    %69 = arith.mulf %60, %2 : vector<2x32xf32>
    %70 = arith.addf %68, %69 : vector<2x32xf32>
    %c0_35 = arith.constant 0 : index
    %c0_36 = arith.constant 0 : index
    %71 = vector.load %arg12[%c0_35, %c0_36] : memref<2x32xf32, #tpu.memory_space<vmem>>, vector<2x32xf32>
    tpu.vector_store %arg12[%c0_35, %c0_36], %70 {strides = array<i32>} : memref<2x32xf32, #tpu.memory_space<vmem>>, vector<2x32xf32>,
    return
  }
}

module attributes {stable_mosaic.version = 11 : i64} {
  func.func @fc_kernel(%arg0: i32, %arg1: memref<2x32xf32, #tpu.memory_space<vmem>>, %arg2: memref<32x128xf32, #tpu.memory_space<vmem>>, %arg3: memref<1x128xf32, #tpu.memory_space<vmem>>, %arg4: memref<2x128xf32, #tpu.memory_space<vmem>>) attributes {dimension_semantics = [#tpu.dimension_semantics<parallel>], iteration_bounds = array<i64: 1>, scalar_prefetch = 0 : i64, scratch_operands = 0 : i64, tpu.core_type = #tpu.core_type<tc>, window_params = [{pipeline_mode = #tpu.pipeline_mode<synchronous>, transform_indices = @transform_0, window_bounds = array<i64: 2, 32>}, {transform_indices = @transform_1, window_bounds = array<i64: 32, 128>}, {transform_indices = @transform_2, window_bounds = array<i64: 1, 128>}, {transform_indices = @transform_3, window_bounds = array<i64: 2, 128>}]} {
    %c0 = arith.constant 0 : index
    %c0_0 = arith.constant 0 : index
    %0 = vector.load %arg1[%c0, %c0_0] : memref<2x32xf32, #tpu.memory_space<vmem>>, vector<2x32xf32>
    %c0_1 = arith.constant 0 : index
    %c0_2 = arith.constant 0 : index
    %1 = vector.load %arg2[%c0_1, %c0_2] : memref<32x128xf32, #tpu.memory_space<vmem>>, vector<32x128xf32>
    %cst = arith.constant dense<0.000000e+00> : vector<2x128xf32>
    %2 = tpu.matmul %0, %1, %cst {dimension_numbers = #tpu.dot_dimension_numbers<[1], [0], [0], [1], [0, 0, 1, 1], [], []>} : vector<2x32xf32>, vector<32x128xf32>, vector<2x128xf32> -> vector<2x128xf32>
    %c0_3 = arith.constant 0 : index
    %c0_4 = arith.constant 0 : index
    %3 = vector.load %arg3[%c0_3, %c0_4] : memref<1x128xf32, #tpu.memory_space<vmem>>, vector<1x128xf32>
    %4 = vector.broadcast %3 : vector<1x128xf32> to vector<2x128xf32>
    %5 = arith.addf %2, %4 : vector<2x128xf32>
    %c0_5 = arith.constant 0 : index
    %c0_6 = arith.constant 0 : index
    %6 = vector.load %arg4[%c0_5, %c0_6] : memref<2x128xf32, #tpu.memory_space<vmem>>, vector<2x128xf32>
    tpu.vector_store %arg4[%c0_5, %c0_6], %5 {strides = array<i32>} : memref<2x128xf32, #tpu.memory_space<vmem>>, vector<2x128xf32>,
    return
  }
  func.func @transform_0(%arg0: i32) -> (i32, i32) {
    %c0_i32 = arith.constant 0 : i32
    %c0_i32_0 = arith.constant 0 : i32
    %c0_i32_1 = arith.constant 0 : i32
    return %c0_i32, %c0_i32_0 : i32, i32
  }
  func.func @transform_1(%arg0: i32) -> (i32, i32) {
    %c0_i32 = arith.constant 0 : i32
    %c0_i32_0 = arith.constant 0 : i32
    return %c0_i32, %arg0 : i32, i32
  }
  func.func @transform_2(%arg0: i32) -> (i32, i32) {
    %c0_i32 = arith.constant 0 : i32
    %c0_i32_0 = arith.constant 0 : i32
    return %c0_i32, %arg0 : i32, i32
  }
  func.func @transform_3(%arg0: i32) -> (i32, i32) {
    %c0_i32 = arith.constant 0 : i32
    %c0_i32_0 = arith.constant 0 : i32
    return %c0_i32, %arg0 : i32, i32
  }
}

</mosaic_0001>

<llo_original>
// kernel: decoder_forward.3
$region0: #{decoder_forward.3}
  #allocation0 [shape = 'u32[]', space=smem, size = 0x4, offset = 0x4, fixed_abs, tag = 'smem constant byte address 0x4 - core index']
  #allocation1 [shape = 'u32[144,128]{1,0:T(1,128)}', space=vmem, size = 0x12000, scoped, tag = 'internal scratch']
  %s0 = inlined_call_operand.vmem [shape: f32[2,32], index: 0, kind: input, shape index: {}]
  %s1 = inlined_call_operand.vmem [shape: f32[32,128], index: 1, kind: input, shape index: {}]
  %s2 = inlined_call_operand.vmem [shape: f32[1,128], index: 2, kind: input, shape index: {}]
  %s3 = inlined_call_operand.hbm [shape: f32[2,128], index: 3, kind: output, shape index: {}]
  %s4 = sld [smem:[#allocation0]]
  $region22: #{decoder_forward.3} parent=0
    _
  %s6 = ssub.s32 1, %s4
  %s7 = scalar_select 0, %s6, %s4
  $region1: #{decoder_forward.3} parent=0
    #allocation2 [shape = 'u8[1024]{0}', space=vmem, size = 0x400, scoped, tag = 'output window, operand 0, single buffered']
    #allocation3 [shape = 's32[1]{0}', space=sflag, size = 0x4, scoped, tag = 'scoped memory for decoder_forward.3']
    %8 = vsyncpa [#allocation3], 0
    // Predicated region
    $region2: #{decoder_forward.3} parent=1 // pred_check
      _
    $region3: #{decoder_forward.3} parent=1 // pred_check_branch
      %10 = sbr.rel (0) target = $region5
    $region4: #{decoder_forward.3} parent=1 // pred_region
      _
    $region5: #{decoder_forward.3} parent=1 // pred_fallthru
      _
    // Predicated region
    $region6: #{decoder_forward.3} parent=1 // pred_check
      _
    $region7: #{decoder_forward.3} parent=1 // pred_check_branch
      %12 = sbr.rel (0) target = $region9
    $region8: #{decoder_forward.3} parent=1 // pred_region
      _
    $region9: #{decoder_forward.3} parent=1 // pred_fallthru
      _
    // Predicated region
    $region10: #{decoder_forward.3} parent=1 // pred_check
      _
    $region11: #{decoder_forward.3} parent=1 // pred_check_branch
      %14 = sbr.rel (0) target = $region13
    $region12: #{decoder_forward.3} parent=1 // pred_region
      _
    $region13: #{decoder_forward.3} parent=1 // pred_fallthru
      _
    %v15 = vld [vmem:[%s0] sm:$0x3]
    %v16 = vld [vmem:[%s1] sm:$0xff]
    %v17 = vld [vmem:[%s1 + $0x8] sm:$0xff]
    %v18 = vld [vmem:[%s1 + $0x10] sm:$0xff]
    %v19 = vld [vmem:[%s1 + $0x18] sm:$0xff]
    %v20 = vld [vmem:[%s2] sm:$0x1]
    %v22 = vlaneseq
    %v23 = vshrl.u32 %v22, 7
    %v24 = vsub.s32 0, %v23
    %v25 = vrot.slane %v20, %v24
    %vm27 = vcmask 261120
    %v29 = vsel %vm27, %v15, 0
    %31 = vmatprep.subr.mxu0 0.0
    %32 = vmatpush1.msra.mxu0 0.0
    %33 = vmatprep.subr.mxu0 0.0
    %34 = vmatpush1.msra.mxu0 0.0
    %35 = vmatprep.subr.mxu0 0.0
    %36 = vmatpush1.msra.mxu0 0.0
    %37 = vmatprep.subr.mxu0 0.0
    %38 = vmatpush1.msra.mxu0 0.0
    %39 = vmatprep.subr.mxu0 0.0
    %40 = vmatpush1.msra.mxu0 0.0
    %41 = vmatprep.subr.mxu0 0.0
    %42 = vmatpush1.msra.mxu0 0.0
    %43 = vmatprep.subr.mxu0 0.0
    %44 = vmatpush1.msra.mxu0 0.0
    %45 = vmatprep.subr.mxu0 0.0
    %46 = vmatpush1.msra.mxu0 0.0
    %47 = vmatprep.subr.mxu0 0.0
    %48 = vmatpush1.msra.mxu0 0.0
    %49 = vmatprep.subr.mxu0 0.0
    %50 = vmatpush1.msra.mxu0 0.0
    %51 = vmatprep.subr.mxu0 0.0
    %52 = vmatpush1.msra.mxu0 0.0
    %53 = vmatprep.subr.mxu0 0.0
    %54 = vmatpush1.msra.mxu0 0.0
    %55 = vmatprep.subr.mxu0 0.0
    %56 = vmatpush1.msra.mxu0 %v19
    %57 = vmatprep.subr.mxu0 0.0
    %58 = vmatpush1.msra.mxu0 %v18
    %59 = vmatprep.subr.mxu0 0.0
    %60 = vmatpush1.msra.mxu0 %v17
    %61 = vmatprep.subr.mxu0 0.0
    %62 = vmatpush1.msra.mxu0 %v16
    %63 = vmatprep.subr.mxu0 0.0
    %64 = vmatpush2.msra.mxu0 0.0
    %65 = vmatprep.subr.mxu0 0.0
    %66 = vmatpush2.msra.mxu0 0.0
    %67 = vmatprep.subr.mxu0 0.0
    %68 = vmatpush2.msra.mxu0 0.0
    %69 = vmatprep.subr.mxu0 0.0
    %70 = vmatpush2.msra.mxu0 0.0
    %71 = vmatprep.subr.mxu0 0.0
    %72 = vmatpush2.msra.mxu0 0.0
    %73 = vmatprep.subr.mxu0 0.0
    %74 = vmatpush2.msra.mxu0 0.0
    %75 = vmatprep.subr.mxu0 0.0
    %76 = vmatpush2.msra.mxu0 0.0
    %77 = vmatprep.subr.mxu0 0.0
    %78 = vmatpush2.msra.mxu0 0.0
    %79 = vmatprep.subr.mxu0 0.0
    %80 = vmatpush2.msra.mxu0 0.0
    %81 = vmatprep.subr.mxu0 0.0
    %82 = vmatpush2.msra.mxu0 0.0
    %83 = vmatprep.subr.mxu0 0.0
    %84 = vmatpush2.msra.mxu0 0.0
    %85 = vmatprep.subr.mxu0 0.0
    %86 = vmatpush2.msra.mxu0 0.0
    %87 = vmatprep.subr.mxu0 0.0
    %88 = vmatpush2.msra.mxu0 0.0
    %89 = vmatprep.subr.mxu0 0.0
    %90 = vmatpush2.msra.mxu0 0.0
    %91 = vmatprep.subr.mxu0 0.0
    %92 = vmatpush2.msra.mxu0 0.0
    %93 = vmatprep.subr.mxu0 0.0
    %94 = vmatpush2.msra.mxu0 0.0
    %95 = vmatprep.mubr.f32.mxu0 0.0
    %96 = vmatmul.mubr.f32.gmra.mxu0 %v29
    %v97 = vpop.f32.mrf.mxu0
    %v98 = vadd.f32 %v25, %v97
    %v99 = vpop.f32.mrf.mxu0
    %100 = vdwg.mxu0
    %101 = vst [vmem:[#allocation2] sm:$0x3] %v98
    // Predicated region
    $region14: #{decoder_forward.3} parent=1 // pred_check
      _
    $region15: #{decoder_forward.3} parent=1 // pred_check_branch
      %103 = sbr.rel (0) target = $region17
    $region16: #{decoder_forward.3} parent=1 // pred_region
      %s105 = ssub.s32 32, 32
      %106 = vsyncadd [#allocation3], %s105
      %s108 = sshll.u32 [#allocation2], 4
      %s109 = int_to_ptr.vmem [resolvable:$true] %s108
      %111 = dma.vmem_to_hbm [thread:$0]  %s109, 32, %s3, [#allocation3]
    $region17: #{decoder_forward.3} parent=1 // pred_fallthru
      _
    // Predicated region
    $region18: #{decoder_forward.3} parent=1 // pred_check
      _
    $region19: #{decoder_forward.3} parent=1 // pred_check_branch
      %113 = sbr.rel (0) target = $region21
    $region20: #{decoder_forward.3} parent=1 // pred_region
      %114 = dma.done [#allocation3], 32
    $region21: #{decoder_forward.3} parent=1 // pred_fallthru
      _
    %115 = vsyncpa [#allocation3], 1

// kernel: decoder_forward.2
$region0: #{decoder_forward.2}
  #allocation0 [shape = 'u32[]', space=smem, size = 0x4, offset = 0x4, fixed_abs, tag = 'smem constant byte address 0x4 - core index']
  #allocation1 [shape = 'u32[144,128]{1,0:T(1,128)}', space=vmem, size = 0x12000, scoped, tag = 'internal scratch']
  %s0 = inlined_call_operand.vmem [shape: f32[2,16], index: 0, kind: input, shape index: {}]
  %s1 = inlined_call_operand.vmem [shape: f32[2,8,64], index: 1, kind: input, shape index: {}]
  %s2 = inlined_call_operand.vmem [shape: f32[2,32], index: 2, kind: input, shape index: {}, may-alias: {2,12}]
  %s3 = inlined_call_operand.vmem [shape: f32[32,32], index: 3, kind: input, shape index: {}]
  %s4 = inlined_call_operand.vmem [shape: f32[64,32], index: 4, kind: input, shape index: {}]
  %s5 = inlined_call_operand.vmem [shape: f32[1,32], index: 5, kind: input, shape index: {}]
  %s6 = inlined_call_operand.hbm [shape: f32[1,32], index: 6, kind: input, shape index: {}]
  %s7 = inlined_call_operand.hbm [shape: f32[16,96], index: 7, kind: input, shape index: {}]
  %s8 = inlined_call_operand.vmem [shape: f32[64,96], index: 8, kind: input, shape index: {}]
  %s9 = inlined_call_operand.vmem [shape: f32[32,96], index: 9, kind: input, shape index: {}]
  %s10 = inlined_call_operand.vmem [shape: f32[1,96], index: 10, kind: input, shape index: {}]
  %s11 = inlined_call_operand.vmem [shape: f32[1,96], index: 11, kind: input, shape index: {}]
  %s12 = inlined_call_operand.vmem [shape: f32[2,32], index: 12, kind: output, shape index: {}, may-alias: {2,12}]
  %s13 = sld [smem:[#allocation0]]
  $region66: #{decoder_forward.2} parent=0
    _
  %s15 = ssub.s32 1, %s13
  %s16 = scalar_select 0, %s15, %s13
  $region1: #{decoder_forward.2} parent=0
    #allocation2 [shape = 'u8[512]{0}', space=vmem, size = 0x400, scoped, tag = 'input window, operand 6, single buffered']
    #allocation3 [shape = 's32[1]{0}', space=sflag, size = 0x4, scoped, tag = 'scoped memory for decoder_forward.2']
    #allocation4 [shape = 'u8[8192]{0}', space=vmem, size = 0x2000, scoped, tag = 'input window, operand 7, single buffered']
    #allocation5 [shape = 's32[1]{0}', space=sflag, size = 0x4, scoped, tag = 'scoped memory for decoder_forward.2']
    %17 = vsyncpa [#allocation3], 0
    %18 = vsyncpa [#allocation5], 0
    // Predicated region
    $region2: #{decoder_forward.2} parent=1 // pred_check
      _
    $region3: #{decoder_forward.2} parent=1 // pred_check_branch
      %20 = sbr.rel (0) target = $region5
    $region4: #{decoder_forward.2} parent=1 // pred_region
      _
    $region5: #{decoder_forward.2} parent=1 // pred_fallthru
      _
    // Predicated region
    $region6: #{decoder_forward.2} parent=1 // pred_check
      _
    $region7: #{decoder_forward.2} parent=1 // pred_check_branch
      %22 = sbr.rel (0) target = $region9
    $region8: #{decoder_forward.2} parent=1 // pred_region
      _
    $region9: #{decoder_forward.2} parent=1 // pred_fallthru
      _
    // Predicated region
    $region10: #{decoder_forward.2} parent=1 // pred_check
      _
    $region11: #{decoder_forward.2} parent=1 // pred_check_branch
      %24 = sbr.rel (0) target = $region13
    $region12: #{decoder_forward.2} parent=1 // pred_region
      _
    $region13: #{decoder_forward.2} parent=1 // pred_fallthru
      _
    // Predicated region
    $region14: #{decoder_forward.2} parent=1 // pred_check
      _
    $region15: #{decoder_forward.2} parent=1 // pred_check_branch
      %26 = sbr.rel (0) target = $region17
    $region16: #{decoder_forward.2} parent=1 // pred_region
      _
    $region17: #{decoder_forward.2} parent=1 // pred_fallthru
      _
    // Predicated region
    $region18: #{decoder_forward.2} parent=1 // pred_check
      _
    $region19: #{decoder_forward.2} parent=1 // pred_check_branch
      %28 = sbr.rel (0) target = $region21
    $region20: #{decoder_forward.2} parent=1 // pred_region
      _
    $region21: #{decoder_forward.2} parent=1 // pred_fallthru
      _
    // Predicated region
    $region22: #{decoder_forward.2} parent=1 // pred_check
      _
    $region23: #{decoder_forward.2} parent=1 // pred_check_branch
      %30 = sbr.rel (0) target = $region25
    $region24: #{decoder_forward.2} parent=1 // pred_region
      _
    $region25: #{decoder_forward.2} parent=1 // pred_fallthru
      _
    // Predicated region
    $region26: #{decoder_forward.2} parent=1 // pred_check
      _
    $region27: #{decoder_forward.2} parent=1 // pred_check_branch
      %32 = sbr.rel (0) target = $region29
    $region28: #{decoder_forward.2} parent=1 // pred_region
      %s34 = ssub.s32 16, 16
      %35 = vsyncadd [#allocation3], %s34
      %s37 = sshll.u32 [#allocation2], 4
      %s38 = int_to_ptr.vmem [resolvable:$true] %s37
      %40 = dma.hbm_to_vmem [thread:$0]  %s6, 16, %s38, [#allocation3]
    $region29: #{decoder_forward.2} parent=1 // pred_fallthru
      _
    // Predicated region
    $region30: #{decoder_forward.2} parent=1 // pred_check
      _
    $region31: #{decoder_forward.2} parent=1 // pred_check_branch
      %42 = sbr.rel (0) target = $region33
    $region32: #{decoder_forward.2} parent=1 // pred_region
      %s44 = ssub.s32 256, 256
      %45 = vsyncadd [#allocation5], %s44
      %s46 = sshll.u32 [#allocation4], 4
      %s47 = int_to_ptr.vmem [resolvable:$true] %s46
      %52 = dma.hbm_to_vmem [thread:$0]  %s7, 256, %s47, [#allocation5], 128, 128, 8
    $region33: #{decoder_forward.2} parent=1 // pred_fallthru
      _
    // Predicated region
    $region34: #{decoder_forward.2} parent=1 // pred_check
      _
    $region35: #{decoder_forward.2} parent=1 // pred_check_branch
      %54 = sbr.rel (0) target = $region37
    $region36: #{decoder_forward.2} parent=1 // pred_region
      _
    $region37: #{decoder_forward.2} parent=1 // pred_fallthru
      _
    // Predicated region
    $region38: #{decoder_forward.2} parent=1 // pred_check
      _
    $region39: #{decoder_forward.2} parent=1 // pred_check_branch
      %56 = sbr.rel (0) target = $region41
    $region40: #{decoder_forward.2} parent=1 // pred_region
      _
    $region41: #{decoder_forward.2} parent=1 // pred_fallthru
      _
    // Predicated region
    $region42: #{decoder_forward.2} parent=1 // pred_check
      _
    $region43: #{decoder_forward.2} parent=1 // pred_check_branch
      %58 = sbr.rel (0) target = $region45
    $region44: #{decoder_forward.2} parent=1 // pred_region
      _
    $region45: #{decoder_forward.2} parent=1 // pred_fallthru
      _
    // Predicated region
    $region46: #{decoder_forward.2} parent=1 // pred_check
      _
    $region47: #{decoder_forward.2} parent=1 // pred_check_branch
      %60 = sbr.rel (0) target = $region49
    $region48: #{decoder_forward.2} parent=1 // pred_region
      _
    $region49: #{decoder_forward.2} parent=1 // pred_fallthru
      _
    // Predicated region
    $region50: #{decoder_forward.2} parent=1 // pred_check
      _
    $region51: #{decoder_forward.2} parent=1 // pred_check_branch
      %62 = sbr.rel (0) target = $region53
    $region52: #{decoder_forward.2} parent=1 // pred_region
      %63 = dma.done [#allocation3], 16
    $region53: #{decoder_forward.2} parent=1 // pred_fallthru
      _
    // Predicated region
    $region54: #{decoder_forward.2} parent=1 // pred_check
      _
    $region55: #{decoder_forward.2} parent=1 // pred_check_branch
      %65 = sbr.rel (0) target = $region57
    $region56: #{decoder_forward.2} parent=1 // pred_region
      %66 = dma.done [#allocation5], 256
    $region57: #{decoder_forward.2} parent=1 // pred_fallthru
      _
    %v67 = vld [vmem:[%s0] sm:$0x3]
    %v68 = vld [vmem:[%s1] sm:$0xff]
    %v69 = vld [vmem:[%s1 + $0x8] sm:$0xff]
    %v70 = vld [vmem:[%s2] sm:$0x3]
    %v71 = vld [vmem:[%s3] sm:$0xff]
    %v72 = vld [vmem:[%s3 + $0x8] sm:$0xff]
    %v73 = vld [vmem:[%s3 + $0x10] sm:$0xff]
    %v74 = vld [vmem:[%s3 + $0x18] sm:$0xff]
    %vm75 = vcmask 261120
    %v77 = vsel %vm75, %v70, 0
    %79 = vmatprep.subr.mxu0 0.0
    %80 = vmatpush1.msra.mxu0 0.0
    %81 = vmatprep.subr.mxu0 0.0
    %82 = vmatpush1.msra.mxu0 0.0
    %83 = vmatprep.subr.mxu0 0.0
    %84 = vmatpush1.msra.mxu0 0.0
    %85 = vmatprep.subr.mxu0 0.0
    %86 = vmatpush1.msra.mxu0 0.0
    %87 = vmatprep.subr.mxu0 0.0
    %88 = vmatpush1.msra.mxu0 0.0
    %89 = vmatprep.subr.mxu0 0.0
    %90 = vmatpush1.msra.mxu0 0.0
    %91 = vmatprep.subr.mxu0 0.0
    %92 = vmatpush1.msra.mxu0 0.0
    %93 = vmatprep.subr.mxu0 0.0
    %94 = vmatpush1.msra.mxu0 0.0
    %95 = vmatprep.subr.mxu0 0.0
    %96 = vmatpush1.msra.mxu0 0.0
    %97 = vmatprep.subr.mxu0 0.0
    %98 = vmatpush1.msra.mxu0 0.0
    %99 = vmatprep.subr.mxu0 0.0
    %100 = vmatpush1.msra.mxu0 0.0
    %101 = vmatprep.subr.mxu0 0.0
    %102 = vmatpush1.msra.mxu0 0.0
    %103 = vmatprep.subr.mxu0 0.0
    %104 = vmatpush1.msra.mxu0 %v74
    %105 = vmatprep.subr.mxu0 0.0
    %106 = vmatpush1.msra.mxu0 %v73
    %107 = vmatprep.subr.mxu0 0.0
    %108 = vmatpush1.msra.mxu0 %v72
    %109 = vmatprep.subr.mxu0 0.0
    %110 = vmatpush1.msra.mxu0 %v71
    %111 = vmatprep.subr.mxu0 0.0
    %112 = vmatpush2.msra.mxu0 0.0
    %113 = vmatprep.subr.mxu0 0.0
    %114 = vmatpush2.msra.mxu0 0.0
    %115 = vmatprep.subr.mxu0 0.0
    %116 = vmatpush2.msra.mxu0 0.0
    %117 = vmatprep.subr.mxu0 0.0
    %118 = vmatpush2.msra.mxu0 0.0
    %119 = vmatprep.subr.mxu0 0.0
    %120 = vmatpush2.msra.mxu0 0.0
    %121 = vmatprep.subr.mxu0 0.0
    %122 = vmatpush2.msra.mxu0 0.0
    %123 = vmatprep.subr.mxu0 0.0
    %124 = vmatpush2.msra.mxu0 0.0
    %125 = vmatprep.subr.mxu0 0.0
    %126 = vmatpush2.msra.mxu0 0.0
    %127 = vmatprep.subr.mxu0 0.0
    %128 = vmatpush2.msra.mxu0 0.0
    %129 = vmatprep.subr.mxu0 0.0
    %130 = vmatpush2.msra.mxu0 0.0
    %131 = vmatprep.subr.mxu0 0.0
    %132 = vmatpush2.msra.mxu0 0.0
    %133 = vmatprep.subr.mxu0 0.0
    %134 = vmatpush2.msra.mxu0 0.0
    %135 = vmatprep.subr.mxu0 0.0
    %136 = vmatpush2.msra.mxu0 0.0
    %137 = vmatprep.subr.mxu0 0.0
    %138 = vmatpush2.msra.mxu0 0.0
    %139 = vmatprep.subr.mxu0 0.0
    %140 = vmatpush2.msra.mxu0 0.0
    %141 = vmatprep.subr.mxu0 0.0
    %142 = vmatpush2.msra.mxu0 0.0
    %143 = vmatprep.mubr.f32.mxu0 0.0
    %144 = vmatmul.mubr.f32.gmra.mxu0 %v77
    %v145 = vpop.f32.mrf.mxu0
    %v146 = vadd.f32 0.0, %v145
    %v147 = vpop.f32.mrf.mxu0
    %148 = vdwg.mxu0
    %v149 = vld [vmem:[%s4] sm:$0xff]
    %v150 = vld [vmem:[%s4 + $0x8] sm:$0xff]
    %v151 = vld [vmem:[%s4 + $0x10] sm:$0xff]
    %v152 = vld [vmem:[%s4 + $0x18] sm:$0xff]
    %v153 = vld [vmem:[%s4 + $0x20] sm:$0xff]
    %v154 = vld [vmem:[%s4 + $0x28] sm:$0xff]
    %v155 = vld [vmem:[%s4 + $0x30] sm:$0xff]
    %v156 = vld [vmem:[%s4 + $0x38] sm:$0xff]
    %v159 = vunpack.c.l.s4 1966171168
    %v160 = vunpack.c.0.s8 %v159
    %v161 = vlaneseq
    %v162 = vshrl.u32 %v161, 7
    %v163 = vsub.s32 %v160, %v162
    %v164 = vrot.slane %v146, %v163
    %v165 = vcombine.high %v164, %v164
    %v167 = vunpack.c.l.s4 1966171168
    %v168 = vunpack.c.0.s8 %v167
    %v169 = vlaneseq
    %v170 = vshrl.u32 %v169, 7
    %v171 = vsub.s32 %v168, %v170
    %v172 = vrot.slane %v164, %v171
    %v174 = vunpack.c.l.s4 1966171168
    %v175 = vunpack.c.0.s8 %v174
    %v176 = vlaneseq
    %v177 = vshrl.u32 %v176, 7
    %v178 = vsub.s32 %v175, %v177
    %v179 = vrot.slane %v165, %v178
    %v180 = vlaneseq
    %v181 = vshrl.u32 %v180, 7
    %v182 = vsub.s32 0, %v181
    %v183 = vrot.slane %v172, %v182
    %v184 = vlaneseq
    %v185 = vshrl.u32 %v184, 7
    %v186 = vsub.s32 0, %v185
    %v187 = vrot.slane %v179, %v186
    %vm190 = vcmask 523264
    %v192 = vsel %vm190, %v68, 0
    %v195 = vsel %vm190, %v69, 0
    %197 = vmatprep.subr.mxu0 0.0
    %198 = vmatpush1.msra.mxu0 0.0
    %199 = vmatprep.subr.mxu0 0.0
    %200 = vmatpush1.msra.mxu0 0.0
    %201 = vmatprep.subr.mxu0 0.0
    %202 = vmatpush1.msra.mxu0 0.0
    %203 = vmatprep.subr.mxu0 0.0
    %204 = vmatpush1.msra.mxu0 0.0
    %205 = vmatprep.subr.mxu0 0.0
    %206 = vmatpush1.msra.mxu0 0.0
    %207 = vmatprep.subr.mxu0 0.0
    %208 = vmatpush1.msra.mxu0 0.0
    %209 = vmatprep.subr.mxu0 0.0
    %210 = vmatpush1.msra.mxu0 0.0
    %211 = vmatprep.subr.mxu0 0.0
    %212 = vmatpush1.msra.mxu0 0.0
    %213 = vmatprep.subr.mxu0 0.0
    %214 = vmatpush1.msra.mxu0 %v156
    %215 = vmatprep.subr.mxu0 0.0
    %216 = vmatpush1.msra.mxu0 %v155
    %217 = vmatprep.subr.mxu0 0.0
    %218 = vmatpush1.msra.mxu0 %v154
    %219 = vmatprep.subr.mxu0 0.0
    %220 = vmatpush1.msra.mxu0 %v153
    %221 = vmatprep.subr.mxu0 0.0
    %222 = vmatpush1.msra.mxu0 %v152
    %223 = vmatprep.subr.mxu0 0.0
    %224 = vmatpush1.msra.mxu0 %v151
    %225 = vmatprep.subr.mxu0 0.0
    %226 = vmatpush1.msra.mxu0 %v150
    %227 = vmatprep.subr.mxu0 0.0
    %228 = vmatpush1.msra.mxu0 %v149
    %229 = vmatprep.subr.mxu0 0.0
    %230 = vmatpush2.msra.mxu0 0.0
    %231 = vmatprep.subr.mxu0 0.0
    %232 = vmatpush2.msra.mxu0 0.0
    %233 = vmatprep.subr.mxu0 0.0
    %234 = vmatpush2.msra.mxu0 0.0
    %235 = vmatprep.subr.mxu0 0.0
    %236 = vmatpush2.msra.mxu0 0.0
    %237 = vmatprep.subr.mxu0 0.0
    %238 = vmatpush2.msra.mxu0 0.0
    %239 = vmatprep.subr.mxu0 0.0
    %240 = vmatpush2.msra.mxu0 0.0
    %241 = vmatprep.subr.mxu0 0.0
    %242 = vmatpush2.msra.mxu0 0.0
    %243 = vmatprep.subr.mxu0 0.0
    %244 = vmatpush2.msra.mxu0 0.0
    %245 = vmatprep.subr.mxu0 0.0
    %246 = vmatpush2.msra.mxu0 0.0
    %247 = vmatprep.subr.mxu0 0.0
    %248 = vmatpush2.msra.mxu0 0.0
    %249 = vmatprep.subr.mxu0 0.0
    %250 = vmatpush2.msra.mxu0 0.0
    %251 = vmatprep.subr.mxu0 0.0
    %252 = vmatpush2.msra.mxu0 0.0
    %253 = vmatprep.subr.mxu0 0.0
    %254 = vmatpush2.msra.mxu0 0.0
    %255 = vmatprep.subr.mxu0 0.0
    %256 = vmatpush2.msra.mxu0 0.0
    %257 = vmatprep.subr.mxu0 0.0
    %258 = vmatpush2.msra.mxu0 0.0
    %259 = vmatprep.subr.mxu0 0.0
    %260 = vmatpush2.msra.mxu0 0.0
    %261 = vmatprep.mubr.f32.mxu0 0.0
    %262 = vmatmul.mubr.f32.gmra.mxu0 %v192
    %v263 = vpop.f32.mrf.mxu0
    %v264 = vadd.f32 %v183, %v263
    %v265 = vpop.f32.mrf.mxu0
    %266 = vmatprep.mubr.f32.mxu0 0.0
    %267 = vmatmul.mubr.f32.gmra.mxu0 %v195
    %v268 = vpop.f32.mrf.mxu0
    %v269 = vadd.f32 %v187, %v268
    %v270 = vpop.f32.mrf.mxu0
    %271 = vdwg.mxu0
    %v272 = vld [vmem:[%s5] sm:$0x1]
    %v274 = vlaneseq
    %v275 = vshrl.u32 %v274, 7
    %v276 = vsub.s32 0, %v275
    %v277 = vrot.slane %v272, %v276
    %v279 = vadd.f32 %v264, %v277
    %v280 = vadd.f32 %v269, %v277
    %v281 = vtanh.pop %v279
    %v282 = vtanh.pop %v280
    %v283 = vld [vmem:[#allocation2] sm:$0x1]
    %v285 = vlaneseq
    %v286 = vshrl.u32 %v285, 7
    %v287 = vsub.s32 0, %v286
    %v288 = vrot.slane %v283, %v287
    %v290 = vmul.f32 %v281, %v288
    %v291 = vmul.f32 %v282, %v288
    %v292 = vsel %vm75, %v290, 0.0
    %293 = vadd.xlane.f32.xlu0 %v292
    %v294 = vpop.xlane.xlu0 %293
    %v295 = vsel %vm75, %v291, 0.0
    %296 = vadd.xlane.f32.xlu0 %v295
    %v297 = vpop.xlane.xlu0 %296
    %v300 = vlaneseq
    %v301 = vand.u32 %v300, 127
    %v302 = vlaneseq
    %v303 = vshrl.u32 %v302, 7
    %v304 = vsub.s32 %v301, %v303
    %v305 = vrot.slane %v294, %v304
    %v306 = vlaneseq
    %v307 = vshrl.u32 %v306, 7
    %v308 = vsub.s32 %v301, %v307
    %v309 = vrot.slane %v297, %v308
    %vm310 = vcmask 1041409
    %v311 = vsel %vm310, %v309, %v305
    %vm313 = vcmask 58368
    %v314 = vsel %vm313, %v311, -inf
    %315 = vmax.xlane.f32.xlu0 %v314
    %v316 = vpop.xlane.xlu0 %315
    %v318 = vlaneseq
    %v319 = vshrl.u32 %v318, 7
    %v320 = vsub.s32 0, %v319
    %v321 = vrot.slane %v316, %v320
    %v322 = vlaneseq
    %v323 = vshrl.u32 %v322, 7
    %v324 = vsub.s32 1, %v323
    %v325 = vrot.slane %v316, %v324
    %v328 = vsub.f32 %v294, %v321
    %v329 = vsub.f32 %v297, %v325
    %v330 = vmul.f32 %v328, 1.442695
    %v331 = vpow.pop %v330
    %v332 = vmul.f32 %v329, 1.442695
    %v333 = vpow.pop %v332
    %336 = vset.pattern.permute.xlu0 0
    %337 = vperm.xlu0 %336, %v331
    %v338 = vpop.permute.xlu0 %337
    %339 = vset.pattern.permute.xlu0 0
    %340 = vperm.xlu0 %339, %v333
    %v341 = vpop.permute.xlu0 %340
    %v342 = vlaneseq
    %v343 = vshrl.u32 %v342, 7
    %v344 = vsub.s32 %v301, %v343
    %v345 = vrot.slane %v338, %v344
    %v346 = vlaneseq
    %v347 = vshrl.u32 %v346, 7
    %v348 = vsub.s32 %v301, %v347
    %v349 = vrot.slane %v341, %v348
    %v350 = vsel %vm310, %v349, %v345
    %v352 = vsel %vm313, %v350, 0.0
    %353 = vadd.xlane.f32.xlu0 %v352
    %v354 = vpop.xlane.xlu0 %353
    %v356 = vlaneseq
    %v357 = vshrl.u32 %v356, 7
    %v358 = vsub.s32 0, %v357
    %v359 = vrot.slane %v354, %v358
    %v360 = vlaneseq
    %v361 = vshrl.u32 %v360, 7
    %v362 = vsub.s32 1, %v361
    %v363 = vrot.slane %v354, %v362
    %v366 = vrcp.pop %v359
    %v367 = vmul.f32 %v331, %v366
    %v368 = vrcp.pop %v363
    %v369 = vmul.f32 %v333, %v368
    %371 = vset.pattern.permute.xlu0 0
    %372 = vperm.xlu0 %371, %v367
    %v373 = vpop.permute.xlu0 %372
    %v374 = vlaneseq
    %v375 = vshrl.u32 %v374, 7
    %v376 = vsub.s32 %v301, %v375
    %v377 = vrot.slane %v373, %v376
    %vm378 = vcmask 64512
    %v379 = vsel %vm378, %v377, 0
    %381 = vmatprep.subr.mxu0 0.0
    %382 = vmatpush1.msra.mxu0 0.0
    %383 = vmatprep.subr.mxu0 0.0
    %384 = vmatpush1.msra.mxu0 0.0
    %385 = vmatprep.subr.mxu0 0.0
    %386 = vmatpush1.msra.mxu0 0.0
    %387 = vmatprep.subr.mxu0 0.0
    %388 = vmatpush1.msra.mxu0 0.0
    %389 = vmatprep.subr.mxu0 0.0
    %390 = vmatpush1.msra.mxu0 0.0
    %391 = vmatprep.subr.mxu0 0.0
    %392 = vmatpush1.msra.mxu0 0.0
    %393 = vmatprep.subr.mxu0 0.0
    %394 = vmatpush1.msra.mxu0 0.0
    %395 = vmatprep.subr.mxu0 0.0
    %396 = vmatpush1.msra.mxu0 0.0
    %397 = vmatprep.subr.mxu0 0.0
    %398 = vmatpush1.msra.mxu0 0.0
    %399 = vmatprep.subr.mxu0 0.0
    %400 = vmatpush1.msra.mxu0 0.0
    %401 = vmatprep.subr.mxu0 0.0
    %402 = vmatpush1.msra.mxu0 0.0
    %403 = vmatprep.subr.mxu0 0.0
    %404 = vmatpush1.msra.mxu0 0.0
    %405 = vmatprep.subr.mxu0 0.0
    %406 = vmatpush1.msra.mxu0 0.0
    %407 = vmatprep.subr.mxu0 0.0
    %408 = vmatpush1.msra.mxu0 0.0
    %409 = vmatprep.subr.mxu0 0.0
    %410 = vmatpush1.msra.mxu0 0.0
    %411 = vmatprep.subr.mxu0 0.0
    %412 = vmatpush1.msra.mxu0 %v68
    %413 = vmatprep.subr.mxu0 0.0
    %414 = vmatpush2.msra.mxu0 0.0
    %415 = vmatprep.subr.mxu0 0.0
    %416 = vmatpush2.msra.mxu0 0.0
    %417 = vmatprep.subr.mxu0 0.0
    %418 = vmatpush2.msra.mxu0 0.0
    %419 = vmatprep.subr.mxu0 0.0
    %420 = vmatpush2.msra.mxu0 0.0
    %421 = vmatprep.subr.mxu0 0.0
    %422 = vmatpush2.msra.mxu0 0.0
    %423 = vmatprep.subr.mxu0 0.0
    %424 = vmatpush2.msra.mxu0 0.0
    %425 = vmatprep.subr.mxu0 0.0
    %426 = vmatpush2.msra.mxu0 0.0
    %427 = vmatprep.subr.mxu0 0.0
    %428 = vmatpush2.msra.mxu0 0.0
    %429 = vmatprep.subr.mxu0 0.0
    %430 = vmatpush2.msra.mxu0 0.0
    %431 = vmatprep.subr.mxu0 0.0
    %432 = vmatpush2.msra.mxu0 0.0
    %433 = vmatprep.subr.mxu0 0.0
    %434 = vmatpush2.msra.mxu0 0.0
    %435 = vmatprep.subr.mxu0 0.0
    %436 = vmatpush2.msra.mxu0 0.0
    %437 = vmatprep.subr.mxu0 0.0
    %438 = vmatpush2.msra.mxu0 0.0
    %439 = vmatprep.subr.mxu0 0.0
    %440 = vmatpush2.msra.mxu0 0.0
    %441 = vmatprep.subr.mxu0 0.0
    %442 = vmatpush2.msra.mxu0 0.0
    %443 = vmatprep.subr.mxu0 0.0
    %444 = vmatpush2.msra.mxu0 0.0
    %445 = vmatprep.mubr.f32.mxu0 0.0
    %446 = vmatmul.mubr.f32.gmra.mxu0 %v379
    %v447 = vpop.f32.mrf.mxu0
    %v448 = vadd.f32 0.0, %v447
    %v449 = vpop.f32.mrf.mxu0
    %450 = vdwg.mxu0
    %452 = vset.pattern.permute.xlu0 0
    %453 = vperm.xlu0 %452, %v369
    %v454 = vpop.permute.xlu0 %453
    %v455 = vlaneseq
    %v456 = vshrl.u32 %v455, 7
    %v457 = vsub.s32 %v301, %v456
    %v458 = vrot.slane %v454, %v457
    %v459 = vsel %vm378, %v458, 0
    %461 = vmatprep.subr.mxu0 0.0
    %462 = vmatpush1.msra.mxu0 0.0
    %463 = vmatprep.subr.mxu0 0.0
    %464 = vmatpush1.msra.mxu0 0.0
    %465 = vmatprep.subr.mxu0 0.0
    %466 = vmatpush1.msra.mxu0 0.0
    %467 = vmatprep.subr.mxu0 0.0
    %468 = vmatpush1.msra.mxu0 0.0
    %469 = vmatprep.subr.mxu0 0.0
    %470 = vmatpush1.msra.mxu0 0.0
    %471 = vmatprep.subr.mxu0 0.0
    %472 = vmatpush1.msra.mxu0 0.0
    %473 = vmatprep.subr.mxu0 0.0
    %474 = vmatpush1.msra.mxu0 0.0
    %475 = vmatprep.subr.mxu0 0.0
    %476 = vmatpush1.msra.mxu0 0.0
    %477 = vmatprep.subr.mxu0 0.0
    %478 = vmatpush1.msra.mxu0 0.0
    %479 = vmatprep.subr.mxu0 0.0
    %480 = vmatpush1.msra.mxu0 0.0
    %481 = vmatprep.subr.mxu0 0.0
    %482 = vmatpush1.msra.mxu0 0.0
    %483 = vmatprep.subr.mxu0 0.0
    %484 = vmatpush1.msra.mxu0 0.0
    %485 = vmatprep.subr.mxu0 0.0
    %486 = vmatpush1.msra.mxu0 0.0
    %487 = vmatprep.subr.mxu0 0.0
    %488 = vmatpush1.msra.mxu0 0.0
    %489 = vmatprep.subr.mxu0 0.0
    %490 = vmatpush1.msra.mxu0 0.0
    %491 = vmatprep.subr.mxu0 0.0
    %492 = vmatpush1.msra.mxu0 %v69
    %493 = vmatprep.subr.mxu0 0.0
    %494 = vmatpush2.msra.mxu0 0.0
    %495 = vmatprep.subr.mxu0 0.0
    %496 = vmatpush2.msra.mxu0 0.0
    %497 = vmatprep.subr.mxu0 0.0
    %498 = vmatpush2.msra.mxu0 0.0
    %499 = vmatprep.subr.mxu0 0.0
    %500 = vmatpush2.msra.mxu0 0.0
    %501 = vmatprep.subr.mxu0 0.0
    %502 = vmatpush2.msra.mxu0 0.0
    %503 = vmatprep.subr.mxu0 0.0
    %504 = vmatpush2.msra.mxu0 0.0
    %505 = vmatprep.subr.mxu0 0.0
    %506 = vmatpush2.msra.mxu0 0.0
    %507 = vmatprep.subr.mxu0 0.0
    %508 = vmatpush2.msra.mxu0 0.0
    %509 = vmatprep.subr.mxu0 0.0
    %510 = vmatpush2.msra.mxu0 0.0
    %511 = vmatprep.subr.mxu0 0.0
    %512 = vmatpush2.msra.mxu0 0.0
    %513 = vmatprep.subr.mxu0 0.0
    %514 = vmatpush2.msra.mxu0 0.0
    %515 = vmatprep.subr.mxu0 0.0
    %516 = vmatpush2.msra.mxu0 0.0
    %517 = vmatprep.subr.mxu0 0.0
    %518 = vmatpush2.msra.mxu0 0.0
    %519 = vmatprep.subr.mxu0 0.0
    %520 = vmatpush2.msra.mxu0 0.0
    %521 = vmatprep.subr.mxu0 0.0
    %522 = vmatpush2.msra.mxu0 0.0
    %523 = vmatprep.subr.mxu0 0.0
    %524 = vmatpush2.msra.mxu0 0.0
    %525 = vmatprep.mubr.f32.mxu0 0.0
    %526 = vmatmul.mubr.f32.gmra.mxu0 %v459
    %v527 = vpop.f32.mrf.mxu0
    %v528 = vadd.f32 0.0, %v527
    %v529 = vpop.f32.mrf.mxu0
    %530 = vdwg.mxu0
    %v531 = vld [vmem:[#allocation4] sm:$0xff]
    %v532 = vld [vmem:[#allocation4 + $0x8] sm:$0xff]
    %v533 = vld [vmem:[%s8] sm:$0xff]
    %v534 = vld [vmem:[%s8 + $0x8] sm:$0xff]
    %v535 = vld [vmem:[%s8 + $0x10] sm:$0xff]
    %v536 = vld [vmem:[%s8 + $0x18] sm:$0xff]
    %v537 = vld [vmem:[%s8 + $0x20] sm:$0xff]
    %v538 = vld [vmem:[%s8 + $0x28] sm:$0xff]
    %v539 = vld [vmem:[%s8 + $0x30] sm:$0xff]
    %v540 = vld [vmem:[%s8 + $0x38] sm:$0xff]
    %v543 = vrot.slane %v528, 7
    %v544 = vsel %vm310, %v543, %v448
    %v545 = vsel %vm190, %v544, 0
    %547 = vmatprep.subr.mxu0 0.0
    %548 = vmatpush1.msra.mxu0 0.0
    %549 = vmatprep.subr.mxu0 0.0
    %550 = vmatpush1.msra.mxu0 0.0
    %551 = vmatprep.subr.mxu0 0.0
    %552 = vmatpush1.msra.mxu0 0.0
    %553 = vmatprep.subr.mxu0 0.0
    %554 = vmatpush1.msra.mxu0 0.0
    %555 = vmatprep.subr.mxu0 0.0
    %556 = vmatpush1.msra.mxu0 0.0
    %557 = vmatprep.subr.mxu0 0.0
    %558 = vmatpush1.msra.mxu0 0.0
    %559 = vmatprep.subr.mxu0 0.0
    %560 = vmatpush1.msra.mxu0 0.0
    %561 = vmatprep.subr.mxu0 0.0
    %562 = vmatpush1.msra.mxu0 0.0
    %563 = vmatprep.subr.mxu0 0.0
    %564 = vmatpush1.msra.mxu0 %v540
    %565 = vmatprep.subr.mxu0 0.0
    %566 = vmatpush1.msra.mxu0 %v539
    %567 = vmatprep.subr.mxu0 0.0
    %568 = vmatpush1.msra.mxu0 %v538
    %569 = vmatprep.subr.mxu0 0.0
    %570 = vmatpush1.msra.mxu0 %v537
    %571 = vmatprep.subr.mxu0 0.0
    %572 = vmatpush1.msra.mxu0 %v536
    %573 = vmatprep.subr.mxu0 0.0
    %574 = vmatpush1.msra.mxu0 %v535
    %575 = vmatprep.subr.mxu0 0.0
    %576 = vmatpush1.msra.mxu0 %v534
    %577 = vmatprep.subr.mxu0 0.0
    %578 = vmatpush1.msra.mxu0 %v533
    %579 = vmatprep.subr.mxu0 0.0
    %580 = vmatpush2.msra.mxu0 0.0
    %581 = vmatprep.subr.mxu0 0.0
    %582 = vmatpush2.msra.mxu0 0.0
    %583 = vmatprep.subr.mxu0 0.0
    %584 = vmatpush2.msra.mxu0 0.0
    %585 = vmatprep.subr.mxu0 0.0
    %586 = vmatpush2.msra.mxu0 0.0
    %587 = vmatprep.subr.mxu0 0.0
    %588 = vmatpush2.msra.mxu0 0.0
    %589 = vmatprep.subr.mxu0 0.0
    %590 = vmatpush2.msra.mxu0 0.0
    %591 = vmatprep.subr.mxu0 0.0
    %592 = vmatpush2.msra.mxu0 0.0
    %593 = vmatprep.subr.mxu0 0.0
    %594 = vmatpush2.msra.mxu0 0.0
    %595 = vmatprep.subr.mxu0 0.0
    %596 = vmatpush2.msra.mxu0 0.0
    %597 = vmatprep.subr.mxu0 0.0
    %598 = vmatpush2.msra.mxu0 0.0
    %599 = vmatprep.subr.mxu0 0.0
    %600 = vmatpush2.msra.mxu0 0.0
    %601 = vmatprep.subr.mxu0 0.0
    %602 = vmatpush2.msra.mxu0 0.0
    %603 = vmatprep.subr.mxu0 0.0
    %604 = vmatpush2.msra.mxu0 0.0
    %605 = vmatprep.subr.mxu0 0.0
    %606 = vmatpush2.msra.mxu0 0.0
    %607 = vmatprep.subr.mxu0 0.0
    %608 = vmatpush2.msra.mxu0 0.0
    %609 = vmatprep.subr.mxu0 0.0
    %610 = vmatpush2.msra.mxu0 0.0
    %611 = vmatprep.mubr.f32.mxu0 0.0
    %612 = vmatmul.mubr.f32.gmra.mxu0 %v545
    %v613 = vpop.f32.mrf.mxu0
    %v614 = vadd.f32 0.0, %v613
    %v615 = vpop.f32.mrf.mxu0
    %616 = vdwg.mxu0
    %vm617 = vcmask 130048
    %v619 = vsel %vm617, %v67, 0
    %621 = vmatprep.subr.mxu0 0.0
    %622 = vmatpush1.msra.mxu0 0.0
    %623 = vmatprep.subr.mxu0 0.0
    %624 = vmatpush1.msra.mxu0 0.0
    %625 = vmatprep.subr.mxu0 0.0
    %626 = vmatpush1.msra.mxu0 0.0
    %627 = vmatprep.subr.mxu0 0.0
    %628 = vmatpush1.msra.mxu0 0.0
    %629 = vmatprep.subr.mxu0 0.0
    %630 = vmatpush1.msra.mxu0 0.0
    %631 = vmatprep.subr.mxu0 0.0
    %632 = vmatpush1.msra.mxu0 0.0
    %633 = vmatprep.subr.mxu0 0.0
    %634 = vmatpush1.msra.mxu0 0.0
    %635 = vmatprep.subr.mxu0 0.0
    %636 = vmatpush1.msra.mxu0 0.0
    %637 = vmatprep.subr.mxu0 0.0
    %638 = vmatpush1.msra.mxu0 0.0
    %639 = vmatprep.subr.mxu0 0.0
    %640 = vmatpush1.msra.mxu0 0.0
    %641 = vmatprep.subr.mxu0 0.0
    %642 = vmatpush1.msra.mxu0 0.0
    %643 = vmatprep.subr.mxu0 0.0
    %644 = vmatpush1.msra.mxu0 0.0
    %645 = vmatprep.subr.mxu0 0.0
    %646 = vmatpush1.msra.mxu0 0.0
    %647 = vmatprep.subr.mxu0 0.0
    %648 = vmatpush1.msra.mxu0 0.0
    %649 = vmatprep.subr.mxu0 0.0
    %650 = vmatpush1.msra.mxu0 %v532
    %651 = vmatprep.subr.mxu0 0.0
    %652 = vmatpush1.msra.mxu0 %v531
    %653 = vmatprep.subr.mxu0 0.0
    %654 = vmatpush2.msra.mxu0 0.0
    %655 = vmatprep.subr.mxu0 0.0
    %656 = vmatpush2.msra.mxu0 0.0
    %657 = vmatprep.subr.mxu0 0.0
    %658 = vmatpush2.msra.mxu0 0.0
    %659 = vmatprep.subr.mxu0 0.0
    %660 = vmatpush2.msra.mxu0 0.0
    %661 = vmatprep.subr.mxu0 0.0
    %662 = vmatpush2.msra.mxu0 0.0
    %663 = vmatprep.subr.mxu0 0.0
    %664 = vmatpush2.msra.mxu0 0.0
    %665 = vmatprep.subr.mxu0 0.0
    %666 = vmatpush2.msra.mxu0 0.0
    %667 = vmatprep.subr.mxu0 0.0
    %668 = vmatpush2.msra.mxu0 0.0
    %669 = vmatprep.subr.mxu0 0.0
    %670 = vmatpush2.msra.mxu0 0.0
    %671 = vmatprep.subr.mxu0 0.0
    %672 = vmatpush2.msra.mxu0 0.0
    %673 = vmatprep.subr.mxu0 0.0
    %674 = vmatpush2.msra.mxu0 0.0
    %675 = vmatprep.subr.mxu0 0.0
    %676 = vmatpush2.msra.mxu0 0.0
    %677 = vmatprep.subr.mxu0 0.0
    %678 = vmatpush2.msra.mxu0 0.0
    %679 = vmatprep.subr.mxu0 0.0
    %680 = vmatpush2.msra.mxu0 0.0
    %681 = vmatprep.subr.mxu0 0.0
    %682 = vmatpush2.msra.mxu0 0.0
    %683 = vmatprep.subr.mxu0 0.0
    %684 = vmatpush2.msra.mxu0 0.0
    %685 = vmatprep.mubr.f32.mxu0 0.0
    %686 = vmatmul.mubr.f32.gmra.mxu0 %v619
    %v687 = vpop.f32.mrf.mxu0
    %v688 = vadd.f32 %v614, %v687
    %v689 = vpop.f32.mrf.mxu0
    %690 = vdwg.mxu0
    %v691 = vld [vmem:[%s10] sm:$0x1]
    %v693 = vlaneseq
    %v694 = vshrl.u32 %v693, 7
    %v695 = vsub.s32 0, %v694
    %v696 = vrot.slane %v691, %v695
    %v698 = vadd.f32 %v688, %v696
    %v699 = vld [vmem:[%s9] sm:$0xff]
    %v700 = vld [vmem:[%s9 + $0x8] sm:$0xff]
    %v701 = vld [vmem:[%s9 + $0x10] sm:$0xff]
    %v702 = vld [vmem:[%s9 + $0x18] sm:$0xff]
    %v703 = vld [vmem:[%s11] sm:$0x1]
    %v705 = vlaneseq
    %v706 = vshrl.u32 %v705, 7
    %v707 = vsub.s32 0, %v706
    %v708 = vrot.slane %v703, %v707
    %710 = vmatprep.subr.mxu0 0.0
    %711 = vmatpush1.msra.mxu0 0.0
    %712 = vmatprep.subr.mxu0 0.0
    %713 = vmatpush1.msra.mxu0 0.0
    %714 = vmatprep.subr.mxu0 0.0
    %715 = vmatpush1.msra.mxu0 0.0
    %716 = vmatprep.subr.mxu0 0.0
    %717 = vmatpush1.msra.mxu0 0.0
    %718 = vmatprep.subr.mxu0 0.0
    %719 = vmatpush1.msra.mxu0 0.0
    %720 = vmatprep.subr.mxu0 0.0
    %721 = vmatpush1.msra.mxu0 0.0
    %722 = vmatprep.subr.mxu0 0.0
    %723 = vmatpush1.msra.mxu0 0.0
    %724 = vmatprep.subr.mxu0 0.0
    %725 = vmatpush1.msra.mxu0 0.0
    %726 = vmatprep.subr.mxu0 0.0
    %727 = vmatpush1.msra.mxu0 0.0
    %728 = vmatprep.subr.mxu0 0.0
    %729 = vmatpush1.msra.mxu0 0.0
    %730 = vmatprep.subr.mxu0 0.0
    %731 = vmatpush1.msra.mxu0 0.0
    %732 = vmatprep.subr.mxu0 0.0
    %733 = vmatpush1.msra.mxu0 0.0
    %734 = vmatprep.subr.mxu0 0.0
    %735 = vmatpush1.msra.mxu0 %v702
    %736 = vmatprep.subr.mxu0 0.0
    %737 = vmatpush1.msra.mxu0 %v701
    %738 = vmatprep.subr.mxu0 0.0
    %739 = vmatpush1.msra.mxu0 %v700
    %740 = vmatprep.subr.mxu0 0.0
    %741 = vmatpush1.msra.mxu0 %v699
    %742 = vmatprep.subr.mxu0 0.0
    %743 = vmatpush2.msra.mxu0 0.0
    %744 = vmatprep.subr.mxu0 0.0
    %745 = vmatpush2.msra.mxu0 0.0
    %746 = vmatprep.subr.mxu0 0.0
    %747 = vmatpush2.msra.mxu0 0.0
    %748 = vmatprep.subr.mxu0 0.0
    %749 = vmatpush2.msra.mxu0 0.0
    %750 = vmatprep.subr.mxu0 0.0
    %751 = vmatpush2.msra.mxu0 0.0
    %752 = vmatprep.subr.mxu0 0.0
    %753 = vmatpush2.msra.mxu0 0.0
    %754 = vmatprep.subr.mxu0 0.0
    %755 = vmatpush2.msra.mxu0 0.0
    %756 = vmatprep.subr.mxu0 0.0
    %757 = vmatpush2.msra.mxu0 0.0
    %758 = vmatprep.subr.mxu0 0.0
    %759 = vmatpush2.msra.mxu0 0.0
    %760 = vmatprep.subr.mxu0 0.0
    %761 = vmatpush2.msra.mxu0 0.0
    %762 = vmatprep.subr.mxu0 0.0
    %763 = vmatpush2.msra.mxu0 0.0
    %764 = vmatprep.subr.mxu0 0.0
    %765 = vmatpush2.msra.mxu0 0.0
    %766 = vmatprep.subr.mxu0 0.0
    %767 = vmatpush2.msra.mxu0 0.0
    %768 = vmatprep.subr.mxu0 0.0
    %769 = vmatpush2.msra.mxu0 0.0
    %770 = vmatprep.subr.mxu0 0.0
    %771 = vmatpush2.msra.mxu0 0.0
    %772 = vmatprep.subr.mxu0 0.0
    %773 = vmatpush2.msra.mxu0 0.0
    %774 = vmatprep.mubr.f32.mxu0 0.0
    %775 = vmatmul.mubr.f32.gmra.mxu0 %v77
    %v776 = vpop.f32.mrf.mxu0
    %v777 = vadd.f32 %v708, %v776
    %v778 = vpop.f32.mrf.mxu0
    %779 = vdwg.mxu0
    %v780 = vadd.f32 %v698, %v777
    %v781 = vxor.u32 %v780, 2147483648
    %v782 = vmul.f32 %v781, 1.442695
    %v783 = vpow.pop %v782
    %v784 = vadd.f32 %v783, 1.0
    %v785 = vrcp.pop %v784
    %v786 = vmul.f32 1.0, %v785
    %788 = vrot.lane.b32.xlu0 %v777, 64
    %v789 = vpop.permute.xlu0 %788
    %v791 = vmul.f32 %v786, %v789
    %793 = vrot.lane.b32.xlu0 %v791, 64
    %v794 = vpop.permute.xlu0 %793
    %v796 = vadd.f32 %v698, %v794
    %v797 = vtanh.pop %v796
    %v798 = vsub.f32 1.0, %v786
    %800 = vrot.lane.b32.xlu0 %v797, 96
    %v801 = vpop.permute.xlu0 %800
    %v803 = vmul.f32 %v798, %v801
    %804 = vrot.lane.b32.xlu0 %v70, 32
    %v805 = vpop.permute.xlu0 %804
    %v807 = vmul.f32 %v786, %v805
    %v808 = vadd.f32 %v803, %v807
    %810 = vrot.lane.b32.xlu0 %v808, 96
    %v811 = vpop.permute.xlu0 %810
    %vm813 = vcmask 254976
    %814 = vst.msk [vmem:[%s12] sm:$0x3] %vm813, %v811
    // Predicated region
    $region58: #{decoder_forward.2} parent=1 // pred_check
      _
    $region59: #{decoder_forward.2} parent=1 // pred_check_branch
      %816 = sbr.rel (0) target = $region61
    $region60: #{decoder_forward.2} parent=1 // pred_region
      _
    $region61: #{decoder_forward.2} parent=1 // pred_fallthru
      _
    // Predicated region
    $region62: #{decoder_forward.2} parent=1 // pred_check
      _
    $region63: #{decoder_forward.2} parent=1 // pred_check_branch
      %818 = sbr.rel (0) target = $region65
    $region64: #{decoder_forward.2} parent=1 // pred_region
      _
    $region65: #{decoder_forward.2} parent=1 // pred_fallthru
      _
    %819 = vsyncpa [#allocation3], 1
    %820 = vsyncpa [#allocation5], 1

</llo_original>
